<compile_context>
chip_gen: v7x
topology: tpu7x:2x2x1
jax: 0.10.0
libtpu: 0.0.40
codegen_flags: <defaults>
</compile_context>

<pallas_src>
import jax
import jax.numpy as jnp
from jax.experimental import pallas as pl
from jax.experimental.pallas import tpu as pltpu


_ROW_BLK = 32   # rows per streamed slab: aligned for int8/bf16/f32 sublane packing
_UNROLL = 8     # fori_loop unroll of the slab loop


def _global_max_pool_kernel(id_ref, feat_ref, out_ref, acc_ref):
    # id_ref   : [tile_rows, L] int8/int16/int32 lane-replicated batch ids (-1 = padding)
    # feat_ref : [tile_rows, L] features in their native dtype (L = k*C lane-packed)
    # out_ref  : [1, B, L]      per-split output (written once, at the last inner step)
    # acc_ref  : [B, 32, L]     VMEM scratch, resident across the inner grid axis
    i = pl.program_id(1)
    num_batches = acc_ref.shape[0]
    tile_rows = feat_ref.shape[0]
    n_slabs = tile_rows // _ROW_BLK

    cdtype = feat_ref.dtype
    neg = jnp.array(-jnp.inf, dtype=cdtype)
    # ids are compared in the feature dtype so compare-mask and select share one
    # layout; integers are only exact in bf16/f16 for small values -> f32 fallback.
    cmp_dtype = cdtype if (num_batches <= 256 or cdtype == jnp.float32) else jnp.float32

    @pl.when(i == 0)
    def _init():
        acc_ref[...] = jnp.full(acc_ref.shape, -jnp.inf, dtype=acc_ref.dtype)

    def body(s, accs):
        r = pl.multiple_of(s * _ROW_BLK, _ROW_BLK)
        slab = feat_ref[pl.ds(r, _ROW_BLK), :]                       # native dtype
        ids = id_ref[pl.ds(r, _ROW_BLK), :].astype(jnp.float32).astype(cmp_dtype)
        return tuple(
            jnp.maximum(accs[b], jnp.where(ids == b, slab, neg))     # pure VPU
            for b in range(num_batches))

    acc0 = acc_ref[...]                      # one VMEM read per grid step
    carry = tuple(acc0[b] for b in range(num_batches))
    carry = jax.lax.fori_loop(0, n_slabs, body, carry, unroll=_UNROLL)
    for b in range(num_batches):             # one VMEM write per batch row, no RMW
        acc_ref[b] = carry[b]

    @pl.when(i == pl.num_programs(1) - 1)
    def _finalize():
        # single cross-sublane reduce per split, done once (not per tile)
        out_ref[0] = jnp.max(acc_ref[...], axis=1).astype(out_ref.dtype)   # [B, L]


def _round_up(x, m):
    return ((x + m - 1) // m) * m


def _tpu_plan():
    """(num_splits, target_block_bytes, vmem_limit_bytes) per TPU generation."""
    kind = ""
    try:
        kind = jax.devices()[0].device_kind.lower()
    except Exception:
        pass
    if "v7" in kind:
        # 2 TensorCores share the chip HBM; smaller (64 MiB) physical VMEM.
        return 2, 2 << 20, 32 * 1024 * 1024
    # v5e / v6e: single TensorCore, 128 MiB physical VMEM.
    return 1, 4 << 20, 64 * 1024 * 1024


def _choose_tile_rows(rows, lane_w, itemsize, num_splits, row_align, target_block_bytes):
    t = target_block_bytes // max(1, lane_w * itemsize)
    t = max(row_align, (t // row_align) * row_align)
    per_split = _round_up(max(1, -(-rows // num_splits)), row_align)
    return max(row_align, min(t, per_split))


def minkowski_global_max_pool(features, batch_index, num_batches,
                              *, tile_rows=None, num_splits=None):
    """features: [N, C]; batch_index: [N] int; returns [num_batches, C] in features.dtype.

    Batches with zero points produce -inf rows (the torch op assumes every batch
    is non-empty).
    """
    n, c = features.shape
    feat_dtype = features.dtype

    def_splits, target_block_bytes, vmem_limit = _tpu_plan()
    if num_splits is None:
        num_splits = def_splits

    # ---- lane packing: k points per vreg row -------------------------------
    k = max(1, 128 // c) if c < 128 else 1
    lane_w = k * c

    if num_batches <= 127:
        id_dtype = jnp.int8
    elif num_batches <= 32767:
        id_dtype = jnp.int16
    else:
        id_dtype = jnp.int32

    n1 = _round_up(n, k)
    if n1 != n:
        features = jnp.pad(features, ((0, n1 - n), (0, 0)))
        batch_index = jnp.pad(batch_index, (0, n1 - n), constant_values=-1)

    rows = n1 // k
    feats_packed = features.reshape(rows, lane_w)
    ids_packed = jnp.broadcast_to(
        batch_index.astype(id_dtype)[:, None], (n1, c)).reshape(rows, lane_w)

    # ---- tiling ------------------------------------------------------------
    row_align = _ROW_BLK * _UNROLL
    if tile_rows is None:
        tile_rows = _choose_tile_rows(rows, lane_w, jnp.dtype(feat_dtype).itemsize,
                                      num_splits, row_align, target_block_bytes)
    tile_rows = max(row_align, _round_up(tile_rows, row_align))

    chunk = num_splits * tile_rows
    rows_pad = _round_up(rows, chunk)
    if rows_pad != rows:
        feats_packed = jnp.pad(feats_packed, ((0, rows_pad - rows), (0, 0)))
        ids_packed = jnp.pad(ids_packed, ((0, rows_pad - rows), (0, 0)),
                             constant_values=-1)
    tiles_per_split = rows_pad // chunk

    grid = (num_splits, tiles_per_split)
    partial = pl.pallas_call(
        _global_max_pool_kernel,
        out_shape=jax.ShapeDtypeStruct((num_splits, num_batches, lane_w), feat_dtype),
        grid_spec=pltpu.PrefetchScalarGridSpec(
            num_scalar_prefetch=0,
            grid=grid,
            in_specs=[
                pl.BlockSpec((tile_rows, lane_w),
                             lambda s, i: (s * tiles_per_split + i, 0)),   # batch ids (int8)
                pl.BlockSpec((tile_rows, lane_w),
                             lambda s, i: (s * tiles_per_split + i, 0)),   # features (native dtype)
            ],
            out_specs=pl.BlockSpec((1, num_batches, lane_w), lambda s, i: (s, 0, 0)),
            scratch_shapes=[pltpu.VMEM((num_batches, _ROW_BLK, lane_w), feat_dtype)],
        ),
        compiler_params=pltpu.CompilerParams(
            dimension_semantics=("parallel", "arbitrary"),
            vmem_limit_bytes=vmem_limit,
        ),
    )(ids_packed, feats_packed)

    # tiny cross-split + lane-group unpack combine in plain XLA
    out = jnp.max(partial.reshape(num_splits, num_batches, k, c), axis=(0, 2))
    return out


if __name__ == "__main__":
    key = jax.random.PRNGKey(0)
    k_feat, k_bidx = jax.random.split(key)

    N = 64    # sparse points
    C = 32    # feature channels
    B = 2     # batches

    features = jax.random.normal(k_feat, (N, C), dtype=jnp.float32)
    batch_index = jax.random.randint(k_bidx, (N,), 0, B, dtype=jnp.int32)
    # guarantee every batch has at least one point (the torch loop assumes it)
    batch_index = batch_index.at[0].set(0).at[1].set(1)

    out = jax.block_until_ready(minkowski_global_max_pool(features, batch_index, B))
    ref = jax.ops.segment_max(features, batch_index, num_segments=B)
    assert out.shape == (B, C)
    assert out.dtype == features.dtype
    assert jnp.allclose(out, ref), "f32 mismatch vs reference segment max"

    # bf16 path: halved HBM stream, bf16-native folding (max is exact in bf16)
    feats_bf16 = features.astype(jnp.bfloat16)
    out_bf16 = jax.block_until_ready(
        minkowski_global_max_pool(feats_bf16, batch_index, B))
    ref_bf16 = jax.ops.segment_max(feats_bf16, batch_index, num_segments=B)
    assert out_bf16.shape == (B, C)
    assert out_bf16.dtype == jnp.bfloat16
    assert jnp.allclose(out_bf16.astype(jnp.float32),
                        ref_bf16.astype(jnp.float32)), "bf16 mismatch vs reference"

    print("KERNEL_OK")
</pallas_src>

<mosaic_0001>
module attributes {stable_mosaic.version = 11 : i64} {
  func.func @_global_max_pool_kernel(%arg0: i32, %arg1: i32, %arg2: memref<256x128xi8, #tpu.memory_space<vmem>>, %arg3: memref<256x128xf32, #tpu.memory_space<vmem>>, %arg4: memref<1x2x128xf32, #tpu.memory_space<vmem>>, %arg5: memref<2x32x128xf32, #tpu.memory_space<vmem>>) attributes {dimension_semantics = [#tpu.dimension_semantics<parallel>, #tpu.dimension_semantics<arbitrary>], iteration_bounds = array<i64: 1, 1>, scalar_prefetch = 0 : i64, scratch_operands = 1 : i64, tpu.core_type = #tpu.core_type<tc>, window_params = [{transform_indices = @transform_0, window_bounds = array<i64: 256, 128>}, {transform_indices = @transform_1, window_bounds = array<i64: 256, 128>}, {transform_indices = @transform_2, window_bounds = array<i64: 1, 2, 128>}]} {
    %c0_i32 = arith.constant 0 : i32
    %0 = arith.cmpi eq, %arg1, %c0_i32 : i32
    %1 = arith.extui %0 : i1 to i32
    %c0_i32_0 = arith.constant 0 : i32
    %2 = arith.cmpi ne, %1, %c0_i32_0 : i32
    scf.if %2 {
      %cst_50 = arith.constant 0xFF800000 : f32
      %153 = vector.broadcast %cst_50 : f32 to vector<2x32x128xf32>
      %c0_51 = arith.constant 0 : index
      %c0_52 = arith.constant 0 : index
      %c0_53 = arith.constant 0 : index
      %154 = vector.load %arg5[%c0_51, %c0_52, %c0_53] : memref<2x32x128xf32, #tpu.memory_space<vmem>>, vector<2x32x128xf32>
      tpu.vector_store %arg5[%c0_51, %c0_52, %c0_53], %153 {strides = array<i32>} : memref<2x32x128xf32, #tpu.memory_space<vmem>>, vector<2x32x128xf32>,
    } else {
    }
    %c0 = arith.constant 0 : index
    %c0_1 = arith.constant 0 : index
    %c0_2 = arith.constant 0 : index
    %3 = vector.load %arg5[%c0, %c0_1, %c0_2] : memref<2x32x128xf32, #tpu.memory_space<vmem>>, vector<2x32x128xf32>
    %4 = vector.extract_strided_slice %3 {offsets = [0, 0, 0], sizes = [1, 32, 128], strides = [1, 1, 1]} : vector<2x32x128xf32> to vector<1x32x128xf32>
    %5 = vector.shape_cast %4 : vector<1x32x128xf32> to vector<32x128xf32>
    %6 = vector.extract_strided_slice %3 {offsets = [1, 0, 0], sizes = [1, 32, 128], strides = [1, 1, 1]} : vector<2x32x128xf32> to vector<1x32x128xf32>
    %7 = vector.shape_cast %6 : vector<1x32x128xf32> to vector<32x128xf32>
    %cst = arith.constant 0xFF800000 : f32
    %c0_i32_3 = arith.constant 0 : i32
    %c32_i32 = arith.constant 32 : i32
    %8 = arith.muli %c0_i32_3, %c32_i32 : i32
    %9 = tpu.assume_multiple %8, 32 : i32
    %10 = arith.index_cast %9 : i32 to index
    %c0_4 = arith.constant 0 : index
    %11 = vector.load %arg3[%10, %c0_4] : memref<256x128xf32, #tpu.memory_space<vmem>>, vector<32x128xf32>
    %12 = arith.index_cast %9 : i32 to index
    %c0_5 = arith.constant 0 : index
    %13 = vector.load %arg2[%12, %c0_5] : memref<256x128xi8, #tpu.memory_space<vmem>>, vector<32x128xi8>
    %14 = arith.sitofp %13 : vector<32x128xi8> to vector<32x128xf32>
    %cst_6 = arith.constant 0.000000e+00 : f32
    %15 = vector.broadcast %cst_6 : f32 to vector<32x128xf32>
    %16 = arith.cmpf oeq, %14, %15 : vector<32x128xf32>
    %17 = vector.broadcast %cst : f32 to vector<32x128xf32>
    %18 = arith.select %16, %11, %17 : vector<32x128xi1>, vector<32x128xf32>
    %19 = arith.maximumf %5, %18 : vector<32x128xf32>
    %cst_7 = arith.constant 1.000000e+00 : f32
    %20 = vector.broadcast %cst_7 : f32 to vector<32x128xf32>
    %21 = arith.cmpf oeq, %14, %20 : vector<32x128xf32>
    %22 = vector.broadcast %cst : f32 to vector<32x128xf32>
    %23 = arith.select %21, %11, %22 : vector<32x128xi1>, vector<32x128xf32>
    %24 = arith.maximumf %7, %23 : vector<32x128xf32>
    %c1_i32 = arith.constant 1 : i32
    %c32_i32_8 = arith.constant 32 : i32
    %25 = arith.muli %c1_i32, %c32_i32_8 : i32
    %26 = tpu.assume_multiple %25, 32 : i32
    %27 = arith.index_cast %26 : i32 to index
    %c0_9 = arith.constant 0 : index
    %28 = vector.load %arg3[%27, %c0_9] : memref<256x128xf32, #tpu.memory_space<vmem>>, vector<32x128xf32>
    %29 = arith.index_cast %26 : i32 to index
    %c0_10 = arith.constant 0 : index
    %30 = vector.load %arg2[%29, %c0_10] : memref<256x128xi8, #tpu.memory_space<vmem>>, vector<32x128xi8>
    %31 = arith.sitofp %30 : vector<32x128xi8> to vector<32x128xf32>
    %cst_11 = arith.constant 0.000000e+00 : f32
    %32 = vector.broadcast %cst_11 : f32 to vector<32x128xf32>
    %33 = arith.cmpf oeq, %31, %32 : vector<32x128xf32>
    %34 = vector.broadcast %cst : f32 to vector<32x128xf32>
    %35 = arith.select %33, %28, %34 : vector<32x128xi1>, vector<32x128xf32>
    %36 = arith.maximumf %19, %35 : vector<32x128xf32>
    %cst_12 = arith.constant 1.000000e+00 : f32
    %37 = vector.broadcast %cst_12 : f32 to vector<32x128xf32>
    %38 = arith.cmpf oeq, %31, %37 : vector<32x128xf32>
    %39 = vector.broadcast %cst : f32 to vector<32x128xf32>
    %40 = arith.select %38, %28, %39 : vector<32x128xi1>, vector<32x128xf32>
    %41 = arith.maximumf %24, %40 : vector<32x128xf32>
    %c2_i32 = arith.constant 2 : i32
    %c32_i32_13 = arith.constant 32 : i32
    %42 = arith.muli %c2_i32, %c32_i32_13 : i32
    %43 = tpu.assume_multiple %42, 32 : i32
    %44 = arith.index_cast %43 : i32 to index
    %c0_14 = arith.constant 0 : index
    %45 = vector.load %arg3[%44, %c0_14] : memref<256x128xf32, #tpu.memory_space<vmem>>, vector<32x128xf32>
    %46 = arith.index_cast %43 : i32 to index
    %c0_15 = arith.constant 0 : index
    %47 = vector.load %arg2[%46, %c0_15] : memref<256x128xi8, #tpu.memory_space<vmem>>, vector<32x128xi8>
    %48 = arith.sitofp %47 : vector<32x128xi8> to vector<32x128xf32>
    %cst_16 = arith.constant 0.000000e+00 : f32
    %49 = vector.broadcast %cst_16 : f32 to vector<32x128xf32>
    %50 = arith.cmpf oeq, %48, %49 : vector<32x128xf32>
    %51 = vector.broadcast %cst : f32 to vector<32x128xf32>
    %52 = arith.select %50, %45, %51 : vector<32x128xi1>, vector<32x128xf32>
    %53 = arith.maximumf %36, %52 : vector<32x128xf32>
    %cst_17 = arith.constant 1.000000e+00 : f32
    %54 = vector.broadcast %cst_17 : f32 to vector<32x128xf32>
    %55 = arith.cmpf oeq, %48, %54 : vector<32x128xf32>
    %56 = vector.broadcast %cst : f32 to vector<32x128xf32>
    %57 = arith.select %55, %45, %56 : vector<32x128xi1>, vector<32x128xf32>
    %58 = arith.maximumf %41, %57 : vector<32x128xf32>
    %c3_i32 = arith.constant 3 : i32
    %c32_i32_18 = arith.constant 32 : i32
    %59 = arith.muli %c3_i32, %c32_i32_18 : i32
    %60 = tpu.assume_multiple %59, 32 : i32
    %61 = arith.index_cast %60 : i32 to index
    %c0_19 = arith.constant 0 : index
    %62 = vector.load %arg3[%61, %c0_19] : memref<256x128xf32, #tpu.memory_space<vmem>>, vector<32x128xf32>
    %63 = arith.index_cast %60 : i32 to index
    %c0_20 = arith.constant 0 : index
    %64 = vector.load %arg2[%63, %c0_20] : memref<256x128xi8, #tpu.memory_space<vmem>>, vector<32x128xi8>
    %65 = arith.sitofp %64 : vector<32x128xi8> to vector<32x128xf32>
    %cst_21 = arith.constant 0.000000e+00 : f32
    %66 = vector.broadcast %cst_21 : f32 to vector<32x128xf32>
    %67 = arith.cmpf oeq, %65, %66 : vector<32x128xf32>
    %68 = vector.broadcast %cst : f32 to vector<32x128xf32>
    %69 = arith.select %67, %62, %68 : vector<32x128xi1>, vector<32x128xf32>
    %70 = arith.maximumf %53, %69 : vector<32x128xf32>
    %cst_22 = arith.constant 1.000000e+00 : f32
    %71 = vector.broadcast %cst_22 : f32 to vector<32x128xf32>
    %72 = arith.cmpf oeq, %65, %71 : vector<32x128xf32>
    %73 = vector.broadcast %cst : f32 to vector<32x128xf32>
    %74 = arith.select %72, %62, %73 : vector<32x128xi1>, vector<32x128xf32>
    %75 = arith.maximumf %58, %74 : vector<32x128xf32>
    %c4_i32 = arith.constant 4 : i32
    %c32_i32_23 = arith.constant 32 : i32
    %76 = arith.muli %c4_i32, %c32_i32_23 : i32
    %77 = tpu.assume_multiple %76, 32 : i32
    %78 = arith.index_cast %77 : i32 to index
    %c0_24 = arith.constant 0 : index
    %79 = vector.load %arg3[%78, %c0_24] : memref<256x128xf32, #tpu.memory_space<vmem>>, vector<32x128xf32>
    %80 = arith.index_cast %77 : i32 to index
    %c0_25 = arith.constant 0 : index
    %81 = vector.load %arg2[%80, %c0_25] : memref<256x128xi8, #tpu.memory_space<vmem>>, vector<32x128xi8>
    %82 = arith.sitofp %81 : vector<32x128xi8> to vector<32x128xf32>
    %cst_26 = arith.constant 0.000000e+00 : f32
    %83 = vector.broadcast %cst_26 : f32 to vector<32x128xf32>
    %84 = arith.cmpf oeq, %82, %83 : vector<32x128xf32>
    %85 = vector.broadcast %cst : f32 to vector<32x128xf32>
    %86 = arith.select %84, %79, %85 : vector<32x128xi1>, vector<32x128xf32>
    %87 = arith.maximumf %70, %86 : vector<32x128xf32>
    %cst_27 = arith.constant 1.000000e+00 : f32
    %88 = vector.broadcast %cst_27 : f32 to vector<32x128xf32>
    %89 = arith.cmpf oeq, %82, %88 : vector<32x128xf32>
    %90 = vector.broadcast %cst : f32 to vector<32x128xf32>
    %91 = arith.select %89, %79, %90 : vector<32x128xi1>, vector<32x128xf32>
    %92 = arith.maximumf %75, %91 : vector<32x128xf32>
    %c5_i32 = arith.constant 5 : i32
    %c32_i32_28 = arith.constant 32 : i32
    %93 = arith.muli %c5_i32, %c32_i32_28 : i32
    %94 = tpu.assume_multiple %93, 32 : i32
    %95 = arith.index_cast %94 : i32 to index
    %c0_29 = arith.constant 0 : index
    %96 = vector.load %arg3[%95, %c0_29] : memref<256x128xf32, #tpu.memory_space<vmem>>, vector<32x128xf32>
    %97 = arith.index_cast %94 : i32 to index
    %c0_30 = arith.constant 0 : index
    %98 = vector.load %arg2[%97, %c0_30] : memref<256x128xi8, #tpu.memory_space<vmem>>, vector<32x128xi8>
    %99 = arith.sitofp %98 : vector<32x128xi8> to vector<32x128xf32>
    %cst_31 = arith.constant 0.000000e+00 : f32
    %100 = vector.broadcast %cst_31 : f32 to vector<32x128xf32>
    %101 = arith.cmpf oeq, %99, %100 : vector<32x128xf32>
    %102 = vector.broadcast %cst : f32 to vector<32x128xf32>
    %103 = arith.select %101, %96, %102 : vector<32x128xi1>, vector<32x128xf32>
    %104 = arith.maximumf %87, %103 : vector<32x128xf32>
    %cst_32 = arith.constant 1.000000e+00 : f32
    %105 = vector.broadcast %cst_32 : f32 to vector<32x128xf32>
    %106 = arith.cmpf oeq, %99, %105 : vector<32x128xf32>
    %107 = vector.broadcast %cst : f32 to vector<32x128xf32>
    %108 = arith.select %106, %96, %107 : vector<32x128xi1>, vector<32x128xf32>
    %109 = arith.maximumf %92, %108 : vector<32x128xf32>
    %c6_i32 = arith.constant 6 : i32
    %c32_i32_33 = arith.constant 32 : i32
    %110 = arith.muli %c6_i32, %c32_i32_33 : i32
    %111 = tpu.assume_multiple %110, 32 : i32
    %112 = arith.index_cast %111 : i32 to index
    %c0_34 = arith.constant 0 : index
    %113 = vector.load %arg3[%112, %c0_34] : memref<256x128xf32, #tpu.memory_space<vmem>>, vector<32x128xf32>
    %114 = arith.index_cast %111 : i32 to index
    %c0_35 = arith.constant 0 : index
    %115 = vector.load %arg2[%114, %c0_35] : memref<256x128xi8, #tpu.memory_space<vmem>>, vector<32x128xi8>
    %116 = arith.sitofp %115 : vector<32x128xi8> to vector<32x128xf32>
    %cst_36 = arith.constant 0.000000e+00 : f32
    %117 = vector.broadcast %cst_36 : f32 to vector<32x128xf32>
    %118 = arith.cmpf oeq, %116, %117 : vector<32x128xf32>
    %119 = vector.broadcast %cst : f32 to vector<32x128xf32>
    %120 = arith.select %118, %113, %119 : vector<32x128xi1>, vector<32x128xf32>
    %121 = arith.maximumf %104, %120 : vector<32x128xf32>
    %cst_37 = arith.constant 1.000000e+00 : f32
    %122 = vector.broadcast %cst_37 : f32 to vector<32x128xf32>
    %123 = arith.cmpf oeq, %116, %122 : vector<32x128xf32>
    %124 = vector.broadcast %cst : f32 to vector<32x128xf32>
    %125 = arith.select %123, %113, %124 : vector<32x128xi1>, vector<32x128xf32>
    %126 = arith.maximumf %109, %125 : vector<32x128xf32>
    %c7_i32 = arith.constant 7 : i32
    %c32_i32_38 = arith.constant 32 : i32
    %127 = arith.muli %c7_i32, %c32_i32_38 : i32
    %128 = tpu.assume_multiple %127, 32 : i32
    %129 = arith.index_cast %128 : i32 to index
    %c0_39 = arith.constant 0 : index
    %130 = vector.load %arg3[%129, %c0_39] : memref<256x128xf32, #tpu.memory_space<vmem>>, vector<32x128xf32>
    %131 = arith.index_cast %128 : i32 to index
    %c0_40 = arith.constant 0 : index
    %132 = vector.load %arg2[%131, %c0_40] : memref<256x128xi8, #tpu.memory_space<vmem>>, vector<32x128xi8>
    %133 = arith.sitofp %132 : vector<32x128xi8> to vector<32x128xf32>
    %cst_41 = arith.constant 0.000000e+00 : f32
    %134 = vector.broadcast %cst_41 : f32 to vector<32x128xf32>
    %135 = arith.cmpf oeq, %133, %134 : vector<32x128xf32>
    %136 = vector.broadcast %cst : f32 to vector<32x128xf32>
    %137 = arith.select %135, %130, %136 : vector<32x128xi1>, vector<32x128xf32>
    %138 = arith.maximumf %121, %137 : vector<32x128xf32>
    %cst_42 = arith.constant 1.000000e+00 : f32
    %139 = vector.broadcast %cst_42 : f32 to vector<32x128xf32>
    %140 = arith.cmpf oeq, %133, %139 : vector<32x128xf32>
    %141 = vector.broadcast %cst : f32 to vector<32x128xf32>
    %142 = arith.select %140, %130, %141 : vector<32x128xi1>, vector<32x128xf32>
    %143 = arith.maximumf %126, %142 : vector<32x128xf32>
    %c8_i32 = arith.constant 8 : i32
    %c0_43 = arith.constant 0 : index
    %c0_44 = arith.constant 0 : index
    %c0_45 = arith.constant 0 : index
    %144 = vector.load %arg5[%c0_43, %c0_44, %c0_45] : memref<2x32x128xf32, #tpu.memory_space<vmem>>, vector<1x32x128xf32>
    %145 = vector.shape_cast %144 : vector<1x32x128xf32> to vector<32x128xf32>
    %146 = vector.shape_cast %138 : vector<32x128xf32> to vector<1x32x128xf32>
    tpu.vector_store %arg5[%c0_43, %c0_44, %c0_45], %146 {strides = array<i32>} : memref<2x32x128xf32, #tpu.memory_space<vmem>>, vector<1x32x128xf32>,
    %c1 = arith.constant 1 : index
    %c0_46 = arith.constant 0 : index
    %c0_47 = arith.constant 0 : index
    %147 = vector.load %arg5[%c1, %c0_46, %c0_47] : memref<2x32x128xf32, #tpu.memory_space<vmem>>, vector<1x32x128xf32>
    %148 = vector.shape_cast %147 : vector<1x32x128xf32> to vector<32x128xf32>
    %149 = vector.shape_cast %143 : vector<32x128xf32> to vector<1x32x128xf32>
    tpu.vector_store %arg5[%c1, %c0_46, %c0_47], %149 {strides = array<i32>} : memref<2x32x128xf32, #tpu.memory_space<vmem>>, vector<1x32x128xf32>,
    %c0_i32_48 = arith.constant 0 : i32
    %150 = arith.cmpi eq, %arg1, %c0_i32_48 : i32
    %151 = arith.extui %150 : i1 to i32
    %c0_i32_49 = arith.constant 0 : i32
    %152 = arith.cmpi ne, %151, %c0_i32_49 : i32
    scf.if %152 {
      %c0_50 = arith.constant 0 : index
      %c0_51 = arith.constant 0 : index
      %c0_52 = arith.constant 0 : index
      %153 = vector.load %arg5[%c0_50, %c0_51, %c0_52] : memref<2x32x128xf32, #tpu.memory_space<vmem>>, vector<2x32x128xf32>
      %cst_53 = arith.constant dense<0xFF800000> : vector<2x128xf32>
      %154 = vector.multi_reduction <maximumf>, %153, %cst_53 [1] : vector<2x32x128xf32> to vector<2x128xf32>
      %c0_54 = arith.constant 0 : index
      %c0_55 = arith.constant 0 : index
      %c0_56 = arith.constant 0 : index
      %155 = vector.load %arg4[%c0_54, %c0_55, %c0_56] : memref<1x2x128xf32, #tpu.memory_space<vmem>>, vector<1x2x128xf32>
      %156 = vector.shape_cast %155 : vector<1x2x128xf32> to vector<2x128xf32>
      %157 = vector.shape_cast %154 : vector<2x128xf32> to vector<1x2x128xf32>
      tpu.vector_store %arg4[%c0_54, %c0_55, %c0_56], %157 {strides = array<i32>} : memref<1x2x128xf32, #tpu.memory_space<vmem>>, vector<1x2x128xf32>,
    } else {
    }
    return
  }
  func.func @transform_0(%arg0: i32, %arg1: i32) -> (i32, i32) {
    %c1_i32 = arith.constant 1 : i32
    %0 = arith.muli %arg0, %c1_i32 : i32
    %1 = arith.addi %0, %arg1 : i32
    %c0_i32 = arith.constant 0 : i32
    %c0_i32_0 = arith.constant 0 : i32
    return %1, %c0_i32 : i32, i32
  }
  func.func @transform_1(%arg0: i32, %arg1: i32) -> (i32, i32) {
    %c1_i32 = arith.constant 1 : i32
    %0 = arith.muli %arg0, %c1_i32 : i32
    %1 = arith.addi %0, %arg1 : i32
    %c0_i32 = arith.constant 0 : i32
    %c0_i32_0 = arith.constant 0 : i32
    return %1, %c0_i32 : i32, i32
  }
  func.func @transform_2(%arg0: i32, %arg1: i32) -> (i32, i32, i32) {
    %c0_i32 = arith.constant 0 : i32
    %c0_i32_0 = arith.constant 0 : i32
    %c0_i32_1 = arith.constant 0 : i32
    return %arg0, %c0_i32, %c0_i32_0 : i32, i32, i32
  }
}

</mosaic_0001>

<llo_original>
// kernel: tpu_custom_call.1
$region0: #{tpu_custom_call.1}
  #allocation0 [shape = 'u32[]', space=smem, size = 0x4, offset = 0x4, fixed_abs, tag = 'smem constant byte address 0x4 - core index']
  #allocation1 [shape = 'u32[144,128]{1,0:T(1,128)}', space=vmem, size = 0x12000, scoped, tag = 'internal scratch']
  #allocation2 [shape = 'f32[2,32,128]{2,1,0:T(8,128)}', space=vmem, size = 0x8000, scoped, tag = 'scratch operand']
  %s0 = inlined_call_operand.hbm [shape: s8[256,128], index: 0, kind: input, shape index: {}]
  %s1 = inlined_call_operand.hbm [shape: f32[256,128], index: 1, kind: input, shape index: {}]
  %s2 = inlined_call_operand.hbm [shape: f32[1,2,128], index: 2, kind: output, shape index: {}]
  %s3 = sld [smem:[#allocation0]]
  $region34: #{tpu_custom_call.1} parent=0
    _
  %s5 = ssub.s32 1, %s3
  %s6 = scalar_select 0, %s5, %s3
  $region1: #{tpu_custom_call.1} parent=0
    #allocation3 [shape = 'u8[32768]{0}', space=vmem, size = 0x8000, scoped, tag = 'input window, operand 0, single buffered']
    #allocation4 [shape = 's32[1]{0}', space=sflag, size = 0x4, scoped, tag = 'scoped memory for tpu_custom_call.1']
    #allocation5 [shape = 's32[1]{0}', space=sflag, size = 0x4, scoped, tag = 'scoped memory for tpu_custom_call.1']
    #allocation6 [shape = 'u8[131072]{0}', space=vmem, size = 0x20000, scoped, tag = 'input window, operand 1, single buffered']
    #allocation7 [shape = 's32[1]{0}', space=sflag, size = 0x4, scoped, tag = 'scoped memory for tpu_custom_call.1']
    #allocation8 [shape = 'u8[1024]{0}', space=vmem, size = 0x400, scoped, tag = 'output window, operand 0, single buffered']
    %7 = vsyncpa [#allocation4], 0
    %8 = vsyncpa [#allocation7], 0
    %9 = vsyncpa [#allocation5], 0
    // Predicated region
    $region2: #{tpu_custom_call.1} parent=1 // pred_check
      _
    $region3: #{tpu_custom_call.1} parent=1 // pred_check_branch
      %11 = sbr.rel (0) target = $region5
    $region4: #{tpu_custom_call.1} parent=1 // pred_region
      %s12 = sadd.s32 0, 0
      %s13 = smul.u32 8, %s12
      %s15 = ssub.s32 1024, 1024
      %16 = vsyncadd [#allocation4], %s15
      %s17 = smul.addr %s13, 128
      %s18 = scalar_lea.hbm %s0, %s17
      %s19 = sshll.u32 [#allocation3], 4
      %s20 = int_to_ptr.vmem [resolvable:$true] %s19
      %25 = dma.hbm_to_vmem [thread:$0]  %s18, 1024, %s20, [#allocation4], 128, 128, 8
    $region5: #{tpu_custom_call.1} parent=1 // pred_fallthru
      _
    // Predicated region
    $region6: #{tpu_custom_call.1} parent=1 // pred_check
      _
    $region7: #{tpu_custom_call.1} parent=1 // pred_check_branch
      %27 = sbr.rel (0) target = $region9
    $region8: #{tpu_custom_call.1} parent=1 // pred_region
      %s28 = sadd.s32 0, 0
      %s29 = smul.u32 32, %s28
      %s31 = ssub.s32 4096, 4096
      %32 = vsyncadd [#allocation7], %s31
      %s33 = smul.addr %s29, 128
      %s34 = scalar_lea.hbm %s1, %s33
      %s35 = sshll.u32 [#allocation6], 4
      %s36 = int_to_ptr.vmem [resolvable:$true] %s35
      %41 = dma.hbm_to_vmem [thread:$0]  %s34, 4096, %s36, [#allocation7], 128, 128, 8
    $region9: #{tpu_custom_call.1} parent=1 // pred_fallthru
      _
    // Predicated region
    $region10: #{tpu_custom_call.1} parent=1 // pred_check
      _
    $region11: #{tpu_custom_call.1} parent=1 // pred_check_branch
      %43 = sbr.rel (0) target = $region13
    $region12: #{tpu_custom_call.1} parent=1 // pred_region
      %44 = dma.done [#allocation4], 1024
    $region13: #{tpu_custom_call.1} parent=1 // pred_fallthru
      _
    // Predicated region
    $region14: #{tpu_custom_call.1} parent=1 // pred_check
      _
    $region15: #{tpu_custom_call.1} parent=1 // pred_check_branch
      %46 = sbr.rel (0) target = $region17
    $region16: #{tpu_custom_call.1} parent=1 // pred_region
      %47 = dma.done [#allocation7], 4096
    $region17: #{tpu_custom_call.1} parent=1 // pred_fallthru
      _
    %s48 = sadd.s32 0, 0
    %s49 = smul.u32 8, %s48
    %s50 = sadd.s32 0, 0
    %s51 = smul.u32 32, %s50
    %p52 = scmp.eq.s32.totalorder 0, 0
    // Predicated region
    $region18: #{tpu_custom_call.1} parent=1 // pred_check
      %p53 = pneg %p52
    $region19: #{tpu_custom_call.1} parent=1 // pred_check_branch
      %55 = sbr.rel (%p53) target = $region21
    $region20: #{tpu_custom_call.1} parent=1 // pred_region
      %56 = vst [vmem:[#allocation2] sm:$0xff] -inf
      %57 = vst [vmem:[#allocation2 + $0x8] sm:$0xff] -inf
      %58 = vst [vmem:[#allocation2 + $0x10] sm:$0xff] -inf
      %59 = vst [vmem:[#allocation2 + $0x18] sm:$0xff] -inf
      %60 = vst [vmem:[#allocation2 + $0x20] sm:$0xff] -inf
      %61 = vst [vmem:[#allocation2 + $0x28] sm:$0xff] -inf
      %62 = vst [vmem:[#allocation2 + $0x30] sm:$0xff] -inf
      %63 = vst [vmem:[#allocation2 + $0x38] sm:$0xff] -inf
    $region21: #{tpu_custom_call.1} parent=1 // pred_fallthru
      _
    %v64 = vld [vmem:[#allocation2] sm:$0xff]
    %v65 = vld [vmem:[#allocation2 + $0x8] sm:$0xff]
    %v66 = vld [vmem:[#allocation2 + $0x10] sm:$0xff]
    %v67 = vld [vmem:[#allocation2 + $0x18] sm:$0xff]
    %v68 = vld [vmem:[#allocation2 + $0x20] sm:$0xff]
    %v69 = vld [vmem:[#allocation2 + $0x28] sm:$0xff]
    %v70 = vld [vmem:[#allocation2 + $0x30] sm:$0xff]
    %v71 = vld [vmem:[#allocation2 + $0x38] sm:$0xff]
    %v72 = vld [vmem:[#allocation6] sm:$0xff]
    %v73 = vld [vmem:[#allocation6 + $0x8] sm:$0xff]
    %v74 = vld [vmem:[#allocation6 + $0x10] sm:$0xff]
    %v75 = vld [vmem:[#allocation6 + $0x18] sm:$0xff]
    %v76 = vld [vmem:[#allocation3] sm:$0xff]
    %v77 = vunpack.c.0.s8 %v76
    %v78 = vunpack.c.1.s8 %v76
    %v79 = vunpack.c.2.s8 %v76
    %v80 = vunpack.c.3.s8 %v76
    %v81 = vcvt.s32.f32 %v77
    %v82 = vcvt.s32.f32 %v78
    %v83 = vcvt.s32.f32 %v79
    %v84 = vcvt.s32.f32 %v80
    %vm85 = vcmp.eq.f32.partialorder %v81, 0.0
    %vm86 = vcmp.eq.f32.partialorder %v82, 0.0
    %vm87 = vcmp.eq.f32.partialorder %v83, 0.0
    %vm88 = vcmp.eq.f32.partialorder %v84, 0.0
    %v89 = vsel %vm85, %v72, -inf
    %v90 = vsel %vm86, %v73, -inf
    %v91 = vsel %vm87, %v74, -inf
    %v92 = vsel %vm88, %v75, -inf
    %v93 = vmax.f32 %v64, %v89
    %v94 = vmax.f32 %v65, %v90
    %v95 = vmax.f32 %v66, %v91
    %v96 = vmax.f32 %v67, %v92
    %vm97 = vcmp.eq.f32.partialorder %v81, 1.0
    %vm98 = vcmp.eq.f32.partialorder %v82, 1.0
    %vm99 = vcmp.eq.f32.partialorder %v83, 1.0
    %vm100 = vcmp.eq.f32.partialorder %v84, 1.0
    %v101 = vsel %vm97, %v72, -inf
    %v102 = vsel %vm98, %v73, -inf
    %v103 = vsel %vm99, %v74, -inf
    %v104 = vsel %vm100, %v75, -inf
    %v105 = vmax.f32 %v68, %v101
    %v106 = vmax.f32 %v69, %v102
    %v107 = vmax.f32 %v70, %v103
    %v108 = vmax.f32 %v71, %v104
    %s109 = scalar_lea.vmem [#allocation6], 32
    %v110 = vld [vmem:[%s109] sm:$0xff]
    %v111 = vld [vmem:[%s109 + $0x8] sm:$0xff]
    %v112 = vld [vmem:[%s109 + $0x10] sm:$0xff]
    %v113 = vld [vmem:[%s109 + $0x18] sm:$0xff]
    %s114 = scalar_lea.vmem [#allocation3], 8
    %v115 = vld [vmem:[%s114] sm:$0xff]
    %v116 = vunpack.c.0.s8 %v115
    %v117 = vunpack.c.1.s8 %v115
    %v118 = vunpack.c.2.s8 %v115
    %v119 = vunpack.c.3.s8 %v115
    %v120 = vcvt.s32.f32 %v116
    %v121 = vcvt.s32.f32 %v117
    %v122 = vcvt.s32.f32 %v118
    %v123 = vcvt.s32.f32 %v119
    %vm124 = vcmp.eq.f32.partialorder %v120, 0.0
    %vm125 = vcmp.eq.f32.partialorder %v121, 0.0
    %vm126 = vcmp.eq.f32.partialorder %v122, 0.0
    %vm127 = vcmp.eq.f32.partialorder %v123, 0.0
    %v128 = vsel %vm124, %v110, -inf
    %v129 = vsel %vm125, %v111, -inf
    %v130 = vsel %vm126, %v112, -inf
    %v131 = vsel %vm127, %v113, -inf
    %v132 = vmax.f32 %v93, %v128
    %v133 = vmax.f32 %v94, %v129
    %v134 = vmax.f32 %v95, %v130
    %v135 = vmax.f32 %v96, %v131
    %vm136 = vcmp.eq.f32.partialorder %v120, 1.0
    %vm137 = vcmp.eq.f32.partialorder %v121, 1.0
    %vm138 = vcmp.eq.f32.partialorder %v122, 1.0
    %vm139 = vcmp.eq.f32.partialorder %v123, 1.0
    %v140 = vsel %vm136, %v110, -inf
    %v141 = vsel %vm137, %v111, -inf
    %v142 = vsel %vm138, %v112, -inf
    %v143 = vsel %vm139, %v113, -inf
    %v144 = vmax.f32 %v105, %v140
    %v145 = vmax.f32 %v106, %v141
    %v146 = vmax.f32 %v107, %v142
    %v147 = vmax.f32 %v108, %v143
    %s148 = scalar_lea.vmem [#allocation6], 64
    %v149 = vld [vmem:[%s148] sm:$0xff]
    %v150 = vld [vmem:[%s148 + $0x8] sm:$0xff]
    %v151 = vld [vmem:[%s148 + $0x10] sm:$0xff]
    %v152 = vld [vmem:[%s148 + $0x18] sm:$0xff]
    %s153 = scalar_lea.vmem [#allocation3], 16
    %v154 = vld [vmem:[%s153] sm:$0xff]
    %v155 = vunpack.c.0.s8 %v154
    %v156 = vunpack.c.1.s8 %v154
    %v157 = vunpack.c.2.s8 %v154
    %v158 = vunpack.c.3.s8 %v154
    %v159 = vcvt.s32.f32 %v155
    %v160 = vcvt.s32.f32 %v156
    %v161 = vcvt.s32.f32 %v157
    %v162 = vcvt.s32.f32 %v158
    %vm163 = vcmp.eq.f32.partialorder %v159, 0.0
    %vm164 = vcmp.eq.f32.partialorder %v160, 0.0
    %vm165 = vcmp.eq.f32.partialorder %v161, 0.0
    %vm166 = vcmp.eq.f32.partialorder %v162, 0.0
    %v167 = vsel %vm163, %v149, -inf
    %v168 = vsel %vm164, %v150, -inf
    %v169 = vsel %vm165, %v151, -inf
    %v170 = vsel %vm166, %v152, -inf
    %v171 = vmax.f32 %v132, %v167
    %v172 = vmax.f32 %v133, %v168
    %v173 = vmax.f32 %v134, %v169
    %v174 = vmax.f32 %v135, %v170
    %vm175 = vcmp.eq.f32.partialorder %v159, 1.0
    %vm176 = vcmp.eq.f32.partialorder %v160, 1.0
    %vm177 = vcmp.eq.f32.partialorder %v161, 1.0
    %vm178 = vcmp.eq.f32.partialorder %v162, 1.0
    %v179 = vsel %vm175, %v149, -inf
    %v180 = vsel %vm176, %v150, -inf
    %v181 = vsel %vm177, %v151, -inf
    %v182 = vsel %vm178, %v152, -inf
    %v183 = vmax.f32 %v144, %v179
    %v184 = vmax.f32 %v145, %v180
    %v185 = vmax.f32 %v146, %v181
    %v186 = vmax.f32 %v147, %v182
    %s187 = scalar_lea.vmem [#allocation6], 96
    %v188 = vld [vmem:[%s187] sm:$0xff]
    %v189 = vld [vmem:[%s187 + $0x8] sm:$0xff]
    %v190 = vld [vmem:[%s187 + $0x10] sm:$0xff]
    %v191 = vld [vmem:[%s187 + $0x18] sm:$0xff]
    %s192 = scalar_lea.vmem [#allocation3], 24
    %v193 = vld [vmem:[%s192] sm:$0xff]
    %v194 = vunpack.c.0.s8 %v193
    %v195 = vunpack.c.1.s8 %v193
    %v196 = vunpack.c.2.s8 %v193
    %v197 = vunpack.c.3.s8 %v193
    %v198 = vcvt.s32.f32 %v194
    %v199 = vcvt.s32.f32 %v195
    %v200 = vcvt.s32.f32 %v196
    %v201 = vcvt.s32.f32 %v197
    %vm202 = vcmp.eq.f32.partialorder %v198, 0.0
    %vm203 = vcmp.eq.f32.partialorder %v199, 0.0
    %vm204 = vcmp.eq.f32.partialorder %v200, 0.0
    %vm205 = vcmp.eq.f32.partialorder %v201, 0.0
    %v206 = vsel %vm202, %v188, -inf
    %v207 = vsel %vm203, %v189, -inf
    %v208 = vsel %vm204, %v190, -inf
    %v209 = vsel %vm205, %v191, -inf
    %v210 = vmax.f32 %v171, %v206
    %v211 = vmax.f32 %v172, %v207
    %v212 = vmax.f32 %v173, %v208
    %v213 = vmax.f32 %v174, %v209
    %vm214 = vcmp.eq.f32.partialorder %v198, 1.0
    %vm215 = vcmp.eq.f32.partialorder %v199, 1.0
    %vm216 = vcmp.eq.f32.partialorder %v200, 1.0
    %vm217 = vcmp.eq.f32.partialorder %v201, 1.0
    %v218 = vsel %vm214, %v188, -inf
    %v219 = vsel %vm215, %v189, -inf
    %v220 = vsel %vm216, %v190, -inf
    %v221 = vsel %vm217, %v191, -inf
    %v222 = vmax.f32 %v183, %v218
    %v223 = vmax.f32 %v184, %v219
    %v224 = vmax.f32 %v185, %v220
    %v225 = vmax.f32 %v186, %v221
    %s226 = scalar_lea.vmem [#allocation6], 128
    %v227 = vld [vmem:[%s226] sm:$0xff]
    %v228 = vld [vmem:[%s226 + $0x8] sm:$0xff]
    %v229 = vld [vmem:[%s226 + $0x10] sm:$0xff]
    %v230 = vld [vmem:[%s226 + $0x18] sm:$0xff]
    %s231 = scalar_lea.vmem [#allocation3], 32
    %v232 = vld [vmem:[%s231] sm:$0xff]
    %v233 = vunpack.c.0.s8 %v232
    %v234 = vunpack.c.1.s8 %v232
    %v235 = vunpack.c.2.s8 %v232
    %v236 = vunpack.c.3.s8 %v232
    %v237 = vcvt.s32.f32 %v233
    %v238 = vcvt.s32.f32 %v234
    %v239 = vcvt.s32.f32 %v235
    %v240 = vcvt.s32.f32 %v236
    %vm241 = vcmp.eq.f32.partialorder %v237, 0.0
    %vm242 = vcmp.eq.f32.partialorder %v238, 0.0
    %vm243 = vcmp.eq.f32.partialorder %v239, 0.0
    %vm244 = vcmp.eq.f32.partialorder %v240, 0.0
    %v245 = vsel %vm241, %v227, -inf
    %v246 = vsel %vm242, %v228, -inf
    %v247 = vsel %vm243, %v229, -inf
    %v248 = vsel %vm244, %v230, -inf
    %v249 = vmax.f32 %v210, %v245
    %v250 = vmax.f32 %v211, %v246
    %v251 = vmax.f32 %v212, %v247
    %v252 = vmax.f32 %v213, %v248
    %vm253 = vcmp.eq.f32.partialorder %v237, 1.0
    %vm254 = vcmp.eq.f32.partialorder %v238, 1.0
    %vm255 = vcmp.eq.f32.partialorder %v239, 1.0
    %vm256 = vcmp.eq.f32.partialorder %v240, 1.0
    %v257 = vsel %vm253, %v227, -inf
    %v258 = vsel %vm254, %v228, -inf
    %v259 = vsel %vm255, %v229, -inf
    %v260 = vsel %vm256, %v230, -inf
    %v261 = vmax.f32 %v222, %v257
    %v262 = vmax.f32 %v223, %v258
    %v263 = vmax.f32 %v224, %v259
    %v264 = vmax.f32 %v225, %v260
    %s265 = scalar_lea.vmem [#allocation6], 160
    %v266 = vld [vmem:[%s265] sm:$0xff]
    %v267 = vld [vmem:[%s265 + $0x8] sm:$0xff]
    %v268 = vld [vmem:[%s265 + $0x10] sm:$0xff]
    %v269 = vld [vmem:[%s265 + $0x18] sm:$0xff]
    %s270 = scalar_lea.vmem [#allocation3], 40
    %v271 = vld [vmem:[%s270] sm:$0xff]
    %v272 = vunpack.c.0.s8 %v271
    %v273 = vunpack.c.1.s8 %v271
    %v274 = vunpack.c.2.s8 %v271
    %v275 = vunpack.c.3.s8 %v271
    %v276 = vcvt.s32.f32 %v272
    %v277 = vcvt.s32.f32 %v273
    %v278 = vcvt.s32.f32 %v274
    %v279 = vcvt.s32.f32 %v275
    %vm280 = vcmp.eq.f32.partialorder %v276, 0.0
    %vm281 = vcmp.eq.f32.partialorder %v277, 0.0
    %vm282 = vcmp.eq.f32.partialorder %v278, 0.0
    %vm283 = vcmp.eq.f32.partialorder %v279, 0.0
    %v284 = vsel %vm280, %v266, -inf
    %v285 = vsel %vm281, %v267, -inf
    %v286 = vsel %vm282, %v268, -inf
    %v287 = vsel %vm283, %v269, -inf
    %v288 = vmax.f32 %v249, %v284
    %v289 = vmax.f32 %v250, %v285
    %v290 = vmax.f32 %v251, %v286
    %v291 = vmax.f32 %v252, %v287
    %vm292 = vcmp.eq.f32.partialorder %v276, 1.0
    %vm293 = vcmp.eq.f32.partialorder %v277, 1.0
    %vm294 = vcmp.eq.f32.partialorder %v278, 1.0
    %vm295 = vcmp.eq.f32.partialorder %v279, 1.0
    %v296 = vsel %vm292, %v266, -inf
    %v297 = vsel %vm293, %v267, -inf
    %v298 = vsel %vm294, %v268, -inf
    %v299 = vsel %vm295, %v269, -inf
    %v300 = vmax.f32 %v261, %v296
    %v301 = vmax.f32 %v262, %v297
    %v302 = vmax.f32 %v263, %v298
    %v303 = vmax.f32 %v264, %v299
    %s304 = scalar_lea.vmem [#allocation6], 192
    %v305 = vld [vmem:[%s304] sm:$0xff]
    %v306 = vld [vmem:[%s304 + $0x8] sm:$0xff]
    %v307 = vld [vmem:[%s304 + $0x10] sm:$0xff]
    %v308 = vld [vmem:[%s304 + $0x18] sm:$0xff]
    %s309 = scalar_lea.vmem [#allocation3], 48
    %v310 = vld [vmem:[%s309] sm:$0xff]
    %v311 = vunpack.c.0.s8 %v310
    %v312 = vunpack.c.1.s8 %v310
    %v313 = vunpack.c.2.s8 %v310
    %v314 = vunpack.c.3.s8 %v310
    %v315 = vcvt.s32.f32 %v311
    %v316 = vcvt.s32.f32 %v312
    %v317 = vcvt.s32.f32 %v313
    %v318 = vcvt.s32.f32 %v314
    %vm319 = vcmp.eq.f32.partialorder %v315, 0.0
    %vm320 = vcmp.eq.f32.partialorder %v316, 0.0
    %vm321 = vcmp.eq.f32.partialorder %v317, 0.0
    %vm322 = vcmp.eq.f32.partialorder %v318, 0.0
    %v323 = vsel %vm319, %v305, -inf
    %v324 = vsel %vm320, %v306, -inf
    %v325 = vsel %vm321, %v307, -inf
    %v326 = vsel %vm322, %v308, -inf
    %v327 = vmax.f32 %v288, %v323
    %v328 = vmax.f32 %v289, %v324
    %v329 = vmax.f32 %v290, %v325
    %v330 = vmax.f32 %v291, %v326
    %vm331 = vcmp.eq.f32.partialorder %v315, 1.0
    %vm332 = vcmp.eq.f32.partialorder %v316, 1.0
    %vm333 = vcmp.eq.f32.partialorder %v317, 1.0
    %vm334 = vcmp.eq.f32.partialorder %v318, 1.0
    %v335 = vsel %vm331, %v305, -inf
    %v336 = vsel %vm332, %v306, -inf
    %v337 = vsel %vm333, %v307, -inf
    %v338 = vsel %vm334, %v308, -inf
    %v339 = vmax.f32 %v300, %v335
    %v340 = vmax.f32 %v301, %v336
    %v341 = vmax.f32 %v302, %v337
    %v342 = vmax.f32 %v303, %v338
    %s343 = scalar_lea.vmem [#allocation6], 224
    %v344 = vld [vmem:[%s343] sm:$0xff]
    %v345 = vld [vmem:[%s343 + $0x8] sm:$0xff]
    %v346 = vld [vmem:[%s343 + $0x10] sm:$0xff]
    %v347 = vld [vmem:[%s343 + $0x18] sm:$0xff]
    %s348 = scalar_lea.vmem [#allocation3], 56
    %v349 = vld [vmem:[%s348] sm:$0xff]
    %v350 = vunpack.c.0.s8 %v349
    %v351 = vunpack.c.1.s8 %v349
    %v352 = vunpack.c.2.s8 %v349
    %v353 = vunpack.c.3.s8 %v349
    %v354 = vcvt.s32.f32 %v350
    %v355 = vcvt.s32.f32 %v351
    %v356 = vcvt.s32.f32 %v352
    %v357 = vcvt.s32.f32 %v353
    %vm358 = vcmp.eq.f32.partialorder %v354, 0.0
    %vm359 = vcmp.eq.f32.partialorder %v355, 0.0
    %vm360 = vcmp.eq.f32.partialorder %v356, 0.0
    %vm361 = vcmp.eq.f32.partialorder %v357, 0.0
    %v362 = vsel %vm358, %v344, -inf
    %v363 = vsel %vm359, %v345, -inf
    %v364 = vsel %vm360, %v346, -inf
    %v365 = vsel %vm361, %v347, -inf
    %v366 = vmax.f32 %v327, %v362
    %v367 = vmax.f32 %v328, %v363
    %v368 = vmax.f32 %v329, %v364
    %v369 = vmax.f32 %v330, %v365
    %vm370 = vcmp.eq.f32.partialorder %v354, 1.0
    %vm371 = vcmp.eq.f32.partialorder %v355, 1.0
    %vm372 = vcmp.eq.f32.partialorder %v356, 1.0
    %vm373 = vcmp.eq.f32.partialorder %v357, 1.0
    %v374 = vsel %vm370, %v344, -inf
    %v375 = vsel %vm371, %v345, -inf
    %v376 = vsel %vm372, %v346, -inf
    %v377 = vsel %vm373, %v347, -inf
    %v378 = vmax.f32 %v339, %v374
    %v379 = vmax.f32 %v340, %v375
    %v380 = vmax.f32 %v341, %v376
    %v381 = vmax.f32 %v342, %v377
    %382 = vst [vmem:[#allocation2] sm:$0xff] %v366
    %383 = vst [vmem:[#allocation2 + $0x8] sm:$0xff] %v367
    %384 = vst [vmem:[#allocation2 + $0x10] sm:$0xff] %v368
    %385 = vst [vmem:[#allocation2 + $0x18] sm:$0xff] %v369
    %s386 = scalar_lea.vmem [#allocation2], 32
    %387 = vst [vmem:[%s386] sm:$0xff] %v378
    %388 = vst [vmem:[%s386 + $0x8] sm:$0xff] %v379
    %389 = vst [vmem:[%s386 + $0x10] sm:$0xff] %v380
    %390 = vst [vmem:[%s386 + $0x18] sm:$0xff] %v381
    // Predicated region
    $region22: #{tpu_custom_call.1} parent=1 // pred_check
      %p391 = pneg %p52
    $region23: #{tpu_custom_call.1} parent=1 // pred_check_branch
      %393 = sbr.rel (%p391) target = $region25
    $region24: #{tpu_custom_call.1} parent=1 // pred_region
      %v394 = vld [vmem:[#allocation2] sm:$0xff]
      %v395 = vld [vmem:[#allocation2 + $0x8] sm:$0xff]
      %v396 = vld [vmem:[#allocation2 + $0x10] sm:$0xff]
      %v397 = vld [vmem:[#allocation2 + $0x18] sm:$0xff]
      %v398 = vld [vmem:[#allocation2 + $0x20] sm:$0xff]
      %v399 = vld [vmem:[#allocation2 + $0x28] sm:$0xff]
      %v400 = vld [vmem:[#allocation2 + $0x30] sm:$0xff]
      %v401 = vld [vmem:[#allocation2 + $0x38] sm:$0xff]
      %v402 = vmax.f32 %v394, %v396
      %v403 = vmax.f32 %v395, %v397
      %v404 = vmax.f32 %v402, %v403
      %v405 = vrot.slane %v404, 4
      %v406 = vmax.f32 %v404, %v405
      %v407 = vrot.slane %v406, 2
      %v408 = vmax.f32 %v406, %v407
      %v409 = vrot.slane %v408, 1
      %v410 = vmax.f32 %v408, %v409
      %v411 = vmax.f32 %v398, %v400
      %v412 = vmax.f32 %v399, %v401
      %v413 = vmax.f32 %v411, %v412
      %v414 = vrot.slane %v413, 4
      %v415 = vmax.f32 %v413, %v414
      %v416 = vrot.slane %v415, 2
      %v417 = vmax.f32 %v415, %v416
      %v418 = vrot.slane %v417, 1
      %v419 = vmax.f32 %v417, %v418
      %vm422 = vcmask 1041409
      %v423 = vsel %vm422, %v419, %v410
      %425 = vst [vmem:[#allocation8] sm:$0x3] %v423
    $region25: #{tpu_custom_call.1} parent=1 // pred_fallthru
      _
    // Predicated region
    $region26: #{tpu_custom_call.1} parent=1 // pred_check
      _
    $region27: #{tpu_custom_call.1} parent=1 // pred_check_branch
      %427 = sbr.rel (0) target = $region29
    $region28: #{tpu_custom_call.1} parent=1 // pred_region
      %s429 = ssub.s32 32, 32
      %430 = vsyncadd [#allocation5], %s429
      %s432 = sshll.u32 [#allocation8], 4
      %s433 = int_to_ptr.vmem [resolvable:$true] %s432
      %435 = dma.vmem_to_hbm [thread:$0]  %s433, 32, %s2, [#allocation5]
    $region29: #{tpu_custom_call.1} parent=1 // pred_fallthru
      _
    // Predicated region
    $region30: #{tpu_custom_call.1} parent=1 // pred_check
      _
    $region31: #{tpu_custom_call.1} parent=1 // pred_check_branch
      %437 = sbr.rel (0) target = $region33
    $region32: #{tpu_custom_call.1} parent=1 // pred_region
      %438 = dma.done [#allocation5], 32
    $region33: #{tpu_custom_call.1} parent=1 // pred_fallthru
      _
    %439 = vsyncpa [#allocation4], 1
    %440 = vsyncpa [#allocation7], 1
    %441 = vsyncpa [#allocation5], 1

</llo_original>
